<compile_context>
chip_gen: v5e
topology: v5e:2x2
jax: 0.10.0
libtpu: 0.0.40
codegen_flags: <defaults>
</compile_context>

<pallas_src>
import functools

import jax
import jax.numpy as jnp
from jax.experimental import pallas as pl
from jax.experimental.pallas import tpu as pltpu

_LANE = 128
_WIDE_LANE = 1024


def _device_kind() -> str:
    try:
        return jax.devices()[0].device_kind.lower()
    except Exception:
        return ""


_KIND = _device_kind()
# v6e / v7x: bigger blocks + native bf16 compute.  Anything older (v5e, v4, or
# unknown) stays conservative: 2 MiB blocks and f32 compute (no bf16 VALU on v5e).
_NEW_GEN = any(t in _KIND for t in ("v6", "v7", "7x"))
_TARGET_BLOCK_BYTES = (4 if _NEW_GEN else 2) * 1024 * 1024


def _aq_kernel(params_ref, x_ref, o_ref, *, compute_dtype):
    # params_ref: SMEM (3,) f32 = [alpha, scale, inv_scale]
    # x_ref / o_ref: (block_rows, lane_w) VMEM tiles in the native dtype.
    alpha = params_ref[0].astype(compute_dtype)
    scale = params_ref[1].astype(compute_dtype)
    inv_scale = params_ref[2].astype(compute_dtype)

    x = x_ref[...].astype(compute_dtype)
    # torch.where(input < alpha, input, alpha): clamp from above; NaN -> alpha.
    clipped = jnp.where(x < alpha, x, alpha)
    # RoundUQ forward: round(x * scale) / scale, with the divide replaced by a
    # precomputed reciprocal multiply (jnp.round == torch.round, half-to-even).
    o_ref[...] = (jnp.round(clipped * scale) * inv_scale).astype(o_ref.dtype)


def _aq_jnp(x, alpha, scale, inv_scale):
    # Plain-XLA path for tiny inputs and the (< lane_w element) ragged tail.
    x32 = x.astype(jnp.float32)
    clipped = jnp.where(x32 < alpha, x32, alpha)
    return (jnp.round(clipped * scale) * inv_scale).astype(x.dtype)


def _aq_pallas_2d(x2d, params, block_rows, compute_dtype):
    q, lane_w = x2d.shape
    grid = (pl.cdiv(q, block_rows),)   # last block may be partial; Pallas masks it
    return pl.pallas_call(
        functools.partial(_aq_kernel, compute_dtype=compute_dtype),
        out_shape=jax.ShapeDtypeStruct((q, lane_w), x2d.dtype),
        grid=grid,
        in_specs=[
            pl.BlockSpec(memory_space=pltpu.SMEM),                 # scalar params
            pl.BlockSpec((block_rows, lane_w), lambda i: (i, 0)),  # x tile
        ],
        out_specs=pl.BlockSpec((block_rows, lane_w), lambda i: (i, 0)),
        compiler_params=pltpu.CompilerParams(
            dimension_semantics=("parallel",),
        ),
    )(params, x2d)


@functools.partial(jax.jit, static_argnames=("abit",))
def aq_forward(x, act_alpha, abit):
    """Forward pass of AQ(abit, act_alpha) on an arbitrary-shaped float input."""
    orig_shape = x.shape
    dtype = x.dtype
    total = x.size
    itemsize = jnp.dtype(dtype).itemsize
    sub = 8 * max(1, 4 // itemsize)          # sublane granularity for this dtype

    levels = 2.0 ** abit - 1.0
    alpha32 = jnp.asarray(act_alpha, dtype=jnp.float32)
    scale = levels / alpha32
    inv_scale = alpha32 / levels             # direct (not 1/scale): 1 fewer rounding

    # Tiny inputs: custom-call + grid overhead dominates; let XLA fuse instead.
    if total < sub * _LANE:
        return _aq_jnp(x, alpha32, scale, inv_scale).reshape(orig_shape)

    params = jnp.stack([alpha32, scale, inv_scale])
    compute_dtype = dtype if (_NEW_GEN and dtype == jnp.bfloat16) else jnp.float32

    # Lane-dense slab: wide (1024) lanes when there is enough data, else 128.
    lane_w = _WIDE_LANE if total >= sub * _WIDE_LANE else _LANE
    q, r = divmod(total, lane_w)

    # Block rows: chip-dependent target bytes, sublane-aligned, capped so the grid
    # has >=2 steps whenever possible (v7x megacore / pipeline overlap).
    desired_rows = max(sub, (_TARGET_BLOCK_BYTES // (lane_w * itemsize)) // sub * sub)
    half_rows = pl.cdiv(pl.cdiv(q, 2), sub) * sub
    block_rows = max(sub, min(desired_rows, half_rows))

    flat = x.reshape(-1)
    if r == 0:
        # Common case: no pad, no slice, no concat -> zero extra HBM traffic.
        out = _aq_pallas_2d(flat.reshape(q, lane_w), params, block_rows, compute_dtype)
        return out.reshape(orig_shape)

    # Ragged flat size: bulk (q * lane_w elems) through Pallas, tiny tail
    # (< lane_w elems) through jnp, then joined.
    bulk = q * lane_w
    out_bulk = _aq_pallas_2d(flat[:bulk].reshape(q, lane_w), params, block_rows,
                             compute_dtype)
    out_tail = _aq_jnp(flat[bulk:], alpha32, scale, inv_scale)
    return jnp.concatenate([out_bulk.reshape(-1), out_tail]).reshape(orig_shape)


def _aq_reference(x, act_alpha, abit):
    # Pure-JAX reference mirroring the PyTorch forward (with the divide).
    alpha = jnp.float32(act_alpha)
    scale = (2.0 ** abit - 1.0) / alpha
    clipped = jnp.where(x < alpha, x, alpha)
    return jnp.round(clipped * scale) / scale


if __name__ == "__main__":
    # Deterministic parameter init (module __init__ takes abit and act_alpha).
    ABIT = 4
    ACT_ALPHA = 2.0

    key = jax.random.PRNGKey(0)
    # NCHW activation, small shape: batch=2, channels=4, spatial=16x16.
    x = jax.random.normal(key, (2, 4, 16, 16), dtype=jnp.float32) * 3.0

    y = jax.block_until_ready(aq_forward(x, ACT_ALPHA, ABIT))
    y_ref = _aq_reference(x, ACT_ALPHA, ABIT)
    assert y.shape == x.shape and y.dtype == x.dtype
    assert jnp.allclose(y, y_ref, atol=1e-6, rtol=1e-6)

    # Also exercise the ragged (bulk Pallas + jnp tail) and partial-last-block
    # paths with a non-128-divisible flat size.
    x2 = jax.random.normal(jax.random.PRNGKey(1), (3, 7, 8, 9), dtype=jnp.float32) * 3.0
    y2 = jax.block_until_ready(aq_forward(x2, ACT_ALPHA, ABIT))
    y2_ref = _aq_reference(x2, ACT_ALPHA, ABIT)
    assert y2.shape == x2.shape and y2.dtype == x2.dtype
    assert jnp.allclose(y2, y2_ref, atol=1e-6, rtol=1e-6)

    # TODO(synk): RoundUQ straight-through backward (grad passthrough) is an
    # autograd rule, not a forward op; only the forward is implemented here.

    print("KERNEL_OK")
</pallas_src>

<mosaic_0001>
module attributes {stable_mosaic.version = 11 : i64} {
  func.func @_aq_kernel(%arg0: i32, %arg1: memref<3xf32, #tpu.memory_space<smem>>, %arg2: memref<8x128xf32, #tpu.memory_space<vmem>>, %arg3: memref<8x128xf32, #tpu.memory_space<vmem>>) attributes {dimension_semantics = [#tpu.dimension_semantics<parallel>], iteration_bounds = array<i64: 2>, scalar_prefetch = 0 : i64, scratch_operands = 0 : i64, tpu.core_type = #tpu.core_type<tc>, window_params = [{transform_indices = @transform_0, window_bounds = array<i64: 3>}, {transform_indices = @transform_1, window_bounds = array<i64: 8, 128>}, {transform_indices = @transform_2, window_bounds = array<i64: 8, 128>}]} {
    %c0 = arith.constant 0 : index
    %0 = memref.load %arg1[%c0] : memref<3xf32, #tpu.memory_space<smem>>
    %c1 = arith.constant 1 : index
    %1 = memref.load %arg1[%c1] : memref<3xf32, #tpu.memory_space<smem>>
    %c2 = arith.constant 2 : index
    %2 = memref.load %arg1[%c2] : memref<3xf32, #tpu.memory_space<smem>>
    %c0_0 = arith.constant 0 : index
    %c0_1 = arith.constant 0 : index
    %3 = vector.load %arg2[%c0_0, %c0_1] : memref<8x128xf32, #tpu.memory_space<vmem>>, vector<8x128xf32>
    %4 = vector.broadcast %0 : f32 to vector<8x128xf32>
    %5 = arith.cmpf olt, %3, %4 : vector<8x128xf32>
    %6 = vector.broadcast %0 : f32 to vector<8x128xf32>
    %7 = arith.select %5, %3, %6 : vector<8x128xi1>, vector<8x128xf32>
    %8 = vector.broadcast %1 : f32 to vector<8x128xf32>
    %9 = arith.mulf %7, %8 : vector<8x128xf32>
    %10 = math.roundeven %9 : vector<8x128xf32>
    %11 = vector.broadcast %2 : f32 to vector<8x128xf32>
    %12 = arith.mulf %10, %11 : vector<8x128xf32>
    %c0_2 = arith.constant 0 : index
    %c0_3 = arith.constant 0 : index
    %13 = vector.load %arg3[%c0_2, %c0_3] : memref<8x128xf32, #tpu.memory_space<vmem>>, vector<8x128xf32>
    tpu.vector_store %arg3[%c0_2, %c0_3], %12 {strides = array<i32>} : memref<8x128xf32, #tpu.memory_space<vmem>>, vector<8x128xf32>,
    return
  }
  func.func @transform_0(%arg0: i32) -> i32 {
    %c0_i32 = arith.constant 0 : i32
    %c0_i32_0 = arith.constant 0 : i32
    return %c0_i32 : i32
  }
  func.func @transform_1(%arg0: i32) -> (i32, i32) {
    %c0_i32 = arith.constant 0 : i32
    %c0_i32_0 = arith.constant 0 : i32
    return %arg0, %c0_i32 : i32, i32
  }
  func.func @transform_2(%arg0: i32) -> (i32, i32) {
    %c0_i32 = arith.constant 0 : i32
    %c0_i32_0 = arith.constant 0 : i32
    return %arg0, %c0_i32 : i32, i32
  }
}

</mosaic_0001>

<llo_original>
// kernel: aq_forward.1
$region0: #{aq_forward.1}
  #allocation0 [shape = 'u32[]', space=smem, size = 0x4, offset = 0x4, fixed_abs, tag = 'smem constant byte address 0x4 - core index']
  #allocation1 [shape = 'u32[72,128]{1,0:T(1,128)}', space=vmem, size = 0x9000, scoped, tag = 'internal scratch']
  %s0 = inlined_call_operand.vmem [shape: f32[3], index: 0, kind: input, shape index: {}]
  %s1 = inlined_call_operand.vmem [shape: f32[16,128], index: 1, kind: input, shape index: {}]
  %s2 = inlined_call_operand.vmem [shape: f32[16,128], index: 2, kind: output, shape index: {}]
  %s3 = sld [smem:[#allocation0]]
  $region45: #{aq_forward.1} parent=0
    _
  %s5 = ssub.s32 1, %s3
  %s6 = scalar_select 0, %s5, %s3
  $region1: #{aq_forward.1} parent=0
    #allocation2 [shape = 'u8[512]{0}', space=smem, size = 0x200, scoped, tag = 'input window, operand 0, single buffered']
    #allocation3 [shape = 's32[2]{0}', space=sflag, size = 0x8, scoped, tag = 'scoped memory for aq_forward.1']
    %7 = vsyncpa [#allocation3], 0
    loop: start=0, step=1, limit=4
    $region2: #{aq_forward.1} parent=1 // loop_pre_header
      _
    $region3: #{aq_forward.1} parent=1 // loop_header
      %s9 = sphi 0, %s13
      %p10 = scmp.ge.s32.totalorder %s9, 4
      %s17 = sphi 0, %s17
      %s19 = sphi 0, %s17
      %s20 = sphi 0, %s19
      %s34 = sphi 0, %s20
      %s40 = sphi 0, %s42
      %s43 = sphi 0, %s40
      %s44 = sphi 0, %s43
      %s60 = sphi 0, %s44
      %s66 = sphi 0, %s68
      %s69 = sphi 0, %s66
      %s70 = sphi 0, %s69
      %s86 = sphi 0, %s70
    $region4: #{aq_forward.1} parent=1 // loop_header_branch
      %12 = sbr.rel (%p10) target = $region8
    $region5: #{aq_forward.1} parent=1 // loop_body
      %s14 = ssub.s32 %s9, 1
      %s15 = ssub.s32 %s9, 2
      %s16 = sadd.s32 %s9, 1
      %s18 = sadd.s32 %s17, 1
      %p21 = scmp.eq.s32.totalorder %s9, 1
      %p22 = scmp.ne.s32.totalorder %s17, %s19
      %p23 = scmp.eq.s32.totalorder %s9, 0
      %p24 = por %p22, %p23
      %p25 = scmp.ne.s32.totalorder %s17, %s19
      %p26 = scmp.eq.s32.totalorder %s14, 1
      %p27 = por %p25, %p26
      %p28 = scmp.ne.s32.totalorder %s19, %s20
      %p29 = scmp.eq.s32.totalorder %s14, 0
      %p30 = por %p28, %p29
      %p31 = scmp.ne.s32.totalorder %s19, %s20
      %p32 = scmp.eq.s32.totalorder %s15, 1
      %p33 = por %p31, %p32
      %p35 = scmp.ne.s32.totalorder %s20, %s34
      %p36 = scmp.eq.s32.totalorder %s15, 0
      %p37 = por %p35, %p36
      %s38 = ssub.s32 %s9, %s16
      %p39 = scmp.eq.s32.totalorder %s38, 0
      %s41 = sadd.s32 %s40, 1
      %s42 = scalar_select %p39, %s40, %s41
      %p45 = pneg %p39
      %p46 = scmp.eq.s32.totalorder %s9, 1
      %p47 = por %p45, %p46
      %p48 = scmp.ne.s32.totalorder %s40, %s43
      %p49 = scmp.eq.s32.totalorder %s9, 0
      %p50 = por %p48, %p49
      %p51 = scmp.ne.s32.totalorder %s40, %s43
      %p52 = scmp.eq.s32.totalorder %s14, 1
      %p53 = por %p51, %p52
      %p54 = scmp.ne.s32.totalorder %s43, %s44
      %p55 = scmp.eq.s32.totalorder %s14, 0
      %p56 = por %p54, %p55
      %p57 = scmp.ne.s32.totalorder %s43, %s44
      %p58 = scmp.eq.s32.totalorder %s15, 1
      %p59 = por %p57, %p58
      %p61 = scmp.ne.s32.totalorder %s44, %s60
      %p62 = scmp.eq.s32.totalorder %s15, 0
      %p63 = por %p61, %p62
      %s64 = ssub.s32 %s9, %s16
      %p65 = scmp.eq.s32.totalorder %s64, 0
      %s67 = sadd.s32 %s66, 1
      %s68 = scalar_select %p65, %s66, %s67
      %p71 = pneg %p65
      %p72 = scmp.eq.s32.totalorder %s9, 1
      %p73 = por %p71, %p72
      %p74 = scmp.ne.s32.totalorder %s66, %s69
      %p75 = scmp.eq.s32.totalorder %s9, 0
      %p76 = por %p74, %p75
      %p77 = scmp.ne.s32.totalorder %s66, %s69
      %p78 = scmp.eq.s32.totalorder %s14, 1
      %p79 = por %p77, %p78
      %p80 = scmp.ne.s32.totalorder %s69, %s70
      %p81 = scmp.eq.s32.totalorder %s14, 0
      %p82 = por %p80, %p81
      %p83 = scmp.ne.s32.totalorder %s69, %s70
      %p84 = scmp.eq.s32.totalorder %s15, 1
      %p85 = por %p83, %p84
      %p87 = scmp.ne.s32.totalorder %s70, %s86
      %p88 = scmp.eq.s32.totalorder %s15, 0
      %p89 = por %p87, %p88
      %p90 = scmp.le.s32.totalorder 1, %s9
      %p91 = scmp.lt.s32.totalorder %s9, 3
      %p92 = pnand %p90, %p91
      %p93 = pneg %p92
      // Predicated region
      $region9: #{aq_forward.1} parent=5 // pred_check
        _
      $region10: #{aq_forward.1} parent=5 // pred_check_branch
        %95 = sbr.rel (%p92) target = $region12
      $region11: #{aq_forward.1} parent=5 // pred_region
        %s96 = ssub.s32 %s9, 1
        // Predicated region
        $region13: #{aq_forward.1} parent=11 // pred_check
          %p97 = pneg %p30
        $region14: #{aq_forward.1} parent=11 // pred_check_branch
          %99 = sbr.rel (%p97) target = $region16
        $region15: #{aq_forward.1} parent=11 // pred_region
          %101 = vsyncadd [#allocation3], 0
          %s103 = sshll.u32 %s0, 4
          %s104 = int_to_ptr.vmem [resolvable:$true] %s103
          %106 = dma.vmem_to_smem %s104, 16, [#allocation2], [#allocation3]
        $region16: #{aq_forward.1} parent=11 // pred_fallthru
          _
      $region12: #{aq_forward.1} parent=5 // pred_fallthru
        _
      %p107 = scmp.lt.s32.totalorder %s9, 2
      // Predicated region
      $region17: #{aq_forward.1} parent=5 // pred_check
        %p108 = pneg %p107
      $region18: #{aq_forward.1} parent=5 // pred_check_branch
        %110 = sbr.rel (%p108) target = $region20
      $region19: #{aq_forward.1} parent=5 // pred_region
        // Predicated region
        $region21: #{aq_forward.1} parent=19 // pred_check
          %p111 = pneg %p50
        $region22: #{aq_forward.1} parent=19 // pred_check_branch
          %113 = sbr.rel (%p111) target = $region24
        $region23: #{aq_forward.1} parent=19 // pred_region
          %p114 = scmp.lt.s32.totalorder %s9, 1
          %s115 = scalar_select %p114, %s9, 1
          %s116 = smul.addr %s115, 8
          %s117 = scalar_lea.vmem %s1, %s116
        $region24: #{aq_forward.1} parent=19 // pred_fallthru
          _
      $region20: #{aq_forward.1} parent=5 // pred_fallthru
        _
      %p118 = scmp.le.s32.totalorder 1, %s9
      %p119 = scmp.lt.s32.totalorder %s9, 3
      %p120 = pnand %p118, %p119
      %p121 = pneg %p120
      // Predicated region
      $region25: #{aq_forward.1} parent=5 // pred_check
        _
      $region26: #{aq_forward.1} parent=5 // pred_check_branch
        %123 = sbr.rel (%p120) target = $region28
      $region27: #{aq_forward.1} parent=5 // pred_region
        %s124 = ssub.s32 %s9, 1
        // Predicated region
        $region29: #{aq_forward.1} parent=27 // pred_check
          %p125 = pneg %p30
        $region30: #{aq_forward.1} parent=27 // pred_check_branch
          %127 = sbr.rel (%p125) target = $region32
        $region31: #{aq_forward.1} parent=27 // pred_region
          %129 = dma.done [#allocation3], 16
        $region32: #{aq_forward.1} parent=27 // pred_fallthru
          _
        %130 = sfence
        %p131 = pneg %p30
        %p132 = pneg %p27
        %p133 = scmp.lt.s32.totalorder %s14, 1
        %s134 = scalar_select %p133, %s14, 1
        %s135 = smul.addr %s134, 8
        %s136 = scalar_lea.vmem %s1, %s135
        %p137 = pneg %p56
        %p138 = pneg %p53
        %p139 = pneg %p82
        %p140 = pneg %p79
        %p141 = scmp.lt.s32.totalorder %s14, 1
        %s142 = scalar_select %p141, %s14, 1
        %s143 = smul.addr %s142, 8
        %s144 = scalar_lea.vmem %s2, %s143
        %p145 = scmp.lt.s32.totalorder %s14, 1
        %s146 = scalar_select %p145, %s14, 1
        %s147 = smul.addr %s146, 8
        %s148 = scalar_lea.vmem %s1, %s147
        %p149 = scmp.lt.s32.totalorder %s14, 1
        %s150 = scalar_select %p149, %s14, 1
        %s151 = smul.addr %s150, 8
        %s152 = scalar_lea.vmem %s2, %s151
        %s153 = sld [smem:[#allocation2]]
        %s154 = sld [smem:[#allocation2 + $0x1]]
        %s155 = sld [smem:[#allocation2 + $0x2]]
        %v156 = vld [vmem:[%s148] sm:$0xff]
        %v157 = vstv %s153
        %vm158 = vcmp.lt.f32.partialorder %v156, %v157
        %v159 = vsel %vm158, %v156, %v157
        %v160 = vstv %s154
        %v161 = vmul.f32 %v159, %v160
        %v162 = vround.ne.pseudo %v161
        %v163 = vstv %s155
        %v164 = vmul.f32 %v162, %v163
        %165 = vst [vmem:[%s152] sm:$0xff] %v164
        %p166 = scmp.lt.s32.totalorder %s14, 1
        %s167 = scalar_select %p166, %s14, 1
        %s168 = smul.addr %s167, 8
        %s169 = scalar_lea.vmem %s2, %s168
        // Predicated region
        $region33: #{aq_forward.1} parent=27 // pred_check
          %p170 = pneg %p79
        $region34: #{aq_forward.1} parent=27 // pred_check_branch
          %172 = sbr.rel (%p170) target = $region36
        $region35: #{aq_forward.1} parent=27 // pred_region
          _
        $region36: #{aq_forward.1} parent=27 // pred_fallthru
          _
      $region28: #{aq_forward.1} parent=5 // pred_fallthru
        _
      %p173 = scmp.le.s32.totalorder 2, %s9
      // Predicated region
      $region37: #{aq_forward.1} parent=5 // pred_check
        %p174 = pneg %p173
      $region38: #{aq_forward.1} parent=5 // pred_check_branch
        %176 = sbr.rel (%p174) target = $region40
      $region39: #{aq_forward.1} parent=5 // pred_region
        %s177 = ssub.s32 %s9, 2
        // Predicated region
        $region41: #{aq_forward.1} parent=39 // pred_check
          %p178 = pneg %p85
        $region42: #{aq_forward.1} parent=39 // pred_check_branch
          %180 = sbr.rel (%p178) target = $region44
        $region43: #{aq_forward.1} parent=39 // pred_region
          %p181 = scmp.lt.s32.totalorder %s15, 1
          %s182 = scalar_select %p181, %s15, 1
          %s183 = smul.addr %s182, 8
          %s184 = scalar_lea.vmem %s2, %s183
        $region44: #{aq_forward.1} parent=39 // pred_fallthru
          _
      $region40: #{aq_forward.1} parent=5 // pred_fallthru
        _
    $region6: #{aq_forward.1} parent=1 // loop_footer
      %s13 = sadd.s32 1, %s9
    $region7: #{aq_forward.1} parent=1 // loop_footer_branch
      %8 = sbr.rel target = $region3
    $region8: #{aq_forward.1} parent=1 // loop_exit
      _
    %185 = vsyncpa [#allocation3], 1
    %s186 = scalar_lea.sflag [#allocation3], 1
    %187 = vsyncpa %s186, 1

</llo_original>
